<compile_context>
chip_gen: v7x
topology: tpu7x:2x2x1
jax: 0.10.0
libtpu: 0.0.40
codegen_flags: <defaults>
</compile_context>

<pallas_src>
import functools

import jax
import jax.numpy as jnp
from jax import lax
from jax.experimental import pallas as pl
from jax.experimental.pallas import tpu as pltpu


def _round_up(n, m):
    return ((n + m - 1) // m) * m


def _pick_tiling(batch, tile_b):
    """Pick (tile_b, chunk).

    tile_b: per-grid-step batch slab (DMA granule), a multiple of `chunk`.
    chunk:  inner-loop column count; bounds the (28, chunk) f32 intermediates.
    Prefers >= 2 grid steps so a v7x megacore can use both TensorCores.
    """
    chunk = max(128, min(1024, _round_up(min(batch, tile_b), 128)))
    tile_b = max(chunk, _round_up(tile_b, chunk))
    tile_b = min(tile_b, _round_up(batch, chunk))
    if tile_b >= 2 * chunk and pl.cdiv(batch, tile_b) < 2:
        tile_b = _round_up(pl.cdiv(batch, 2), chunk)
    return tile_b, chunk


def _mlp_kernel(x_ref,
                w1_ref, b1_ref,
                w2_ref, b2_ref,
                w3_ref, b3_ref,
                wo_ref, bo_ref,
                out_ref,
                *, chunk, compute_dtype):
    """One batch tile.

    x_ref:   (TILE_B, 14) in native row-major layout (contiguous HBM read).
    out_ref: (1, TILE_B) lane-dense output row.
    An inner chunk loop bounds the (28, chunk) f32 intermediates so TILE_B can
    grow (amortizing the ~0.35us/step grid overhead) without VMEM pressure.
    """
    # Tiny resident weights: load once per tile, reused by every chunk.
    w1 = w1_ref[...]
    b1 = b1_ref[...]
    w2 = w2_ref[...]
    b2 = b2_ref[...]
    w3 = w3_ref[...]
    b3 = b3_ref[...]
    wo = wo_ref[...]
    bo = bo_ref[...]

    n_chunks = out_ref.shape[-1] // chunk

    @pl.loop(0, n_chunks)
    def _(c):
        col = pl.multiple_of(c * chunk, chunk)
        # Native-layout x chunk; cast to the MXU dtype in-kernel so HBM traffic
        # stays at the producer's dtype (no wrapper-side cast pass over x).
        xb = x_ref[pl.ds(col, chunk), :].astype(compute_dtype)        # (chunk, 14)

        # Layer 1 contracts on the feature axis of the *untransposed* x chunk,
        # folding the batch->lane transpose into the MXU pass:
        #   h[m, b] = sum_k w1[m, k] * x[b, k]                         # (28, chunk)
        h = lax.dot_general(w1, xb,
                            dimension_numbers=(((1,), (1,)), ((), ())),
                            preferred_element_type=jnp.float32)
        h = jnp.maximum(h + b1, 0.0)

        # Layers 2 & 3: batch stays on the lane axis; f32 accumulation and f32
        # bias/ReLU (v5e's VPU has no bf16 path).
        h = jnp.dot(w2, h.astype(compute_dtype),
                    preferred_element_type=jnp.float32)
        h = jnp.maximum(h + b2, 0.0)
        h = jnp.dot(w3, h.astype(compute_dtype),
                    preferred_element_type=jnp.float32)
        h = jnp.maximum(h + b3, 0.0)                                   # (28, chunk) f32

        # Output layer (28 -> 1): VPU multiply + sublane (XLU) reduction instead
        # of a degenerate one-row MXU matmul; store a lane-dense (1, chunk) slab.
        o = jnp.sum(wo * h, axis=0, keepdims=True) + bo                # (1, chunk)
        out_ref[:, pl.ds(col, chunk)] = o.astype(out_ref.dtype)


@functools.partial(jax.jit, static_argnames=("tile_b", "compute_dtype"))
def net_forward(x, params, *, tile_b=16384, compute_dtype=jnp.bfloat16):
    """Fused MLP forward pass.

    Args:
      x: (batch, 14) float input (f32 or bf16; bf16 halves x's HBM traffic).
      params: dict with PyTorch-layout weights w* (out, in) and biases b* (out, 1).
      tile_b: requested batch tile (DMA granule); rounded/clamped internally.
      compute_dtype: MXU operand dtype (default bf16). Accumulation, biases,
        ReLU and the output layer are always f32.
    Returns:
      (batch, 1) float32 output, matching the PyTorch module.
    """
    batch, feat = x.shape
    tile_b, chunk = _pick_tiling(batch, tile_b)
    n_tiles = pl.cdiv(batch, tile_b)
    batch_p = n_tiles * tile_b

    if batch < tile_b:
        # Single-tile case: pad the (small) batch so the only block is full.
        # Multi-tile batches are read as-is: the partial last block's padding
        # columns are independent garbage and are sliced off below.
        x = jnp.pad(x, ((0, tile_b - batch), (0, 0)))

    # Hidden-layer weights in the MXU dtype; output weight + biases stay f32.
    w1 = params["w1"].astype(compute_dtype)
    w2 = params["w2"].astype(compute_dtype)
    w3 = params["w3"].astype(compute_dtype)
    wo_col = params["wo"].T                                            # (28, 1) f32
    b1, b2, b3, bo = params["b1"], params["b2"], params["b3"], params["bo"]

    consts = (w1, b1, w2, b2, w3, b3, wo_col, bo)
    _const_map = lambda i: (0, 0)        # DMA'd once, VMEM-resident across tiles.
    in_specs = [pl.BlockSpec((tile_b, feat), lambda i: (i, 0))]
    in_specs += [pl.BlockSpec(a.shape, _const_map) for a in consts]

    out = pl.pallas_call(
        functools.partial(_mlp_kernel, chunk=chunk, compute_dtype=compute_dtype),
        out_shape=jax.ShapeDtypeStruct((1, batch_p), jnp.float32),
        grid=(n_tiles,),
        in_specs=in_specs,
        out_specs=pl.BlockSpec((1, tile_b), lambda i: (0, i)),
        compiler_params=pltpu.CompilerParams(
            dimension_semantics=("parallel",),
            # The (TILE_B, 14) block lane-pads 14->128 in VMEM (~TILE_B*512 B
            # per buffer, double-buffered). 32 MiB scoped covers the default
            # TILE_B=16384 on v5e/v6e/v7x alike.
            vmem_limit_bytes=32 * 1024 * 1024,
        ),
    )(x, *consts)

    # (1, batch_p) lane-dense kernel output -> (batch, 1) like the PyTorch module.
    return out[:, :batch].T


def init_params(key):
    """Deterministic init matching the PyTorch module's shapes.

    Weights in nn.Linear layout (out_features, in_features); biases as
    (out_features, 1) columns for the batch-on-lanes kernel layout.
    """
    ks = jax.random.split(key, 8)

    def linear(kw, kb, fan_in, fan_out):
        bound = 1.0 / float(fan_in) ** 0.5
        w = jax.random.uniform(kw, (fan_out, fan_in), jnp.float32, -bound, bound)
        b = jax.random.uniform(kb, (fan_out, 1), jnp.float32, -bound, bound)
        return w, b

    w1, b1 = linear(ks[0], ks[1], 14, 28)
    w2, b2 = linear(ks[2], ks[3], 28, 28)
    w3, b3 = linear(ks[4], ks[5], 28, 28)
    wo, bo = linear(ks[6], ks[7], 28, 1)
    return dict(w1=w1, b1=b1, w2=w2, b2=b2, w3=w3, b3=b3, wo=wo, bo=bo)


def net_forward_ref(x, p):
    """Pure-JAX reference (PyTorch semantics: y = x @ W.T + b)."""
    h1 = jax.nn.relu(x @ p["w1"].T + p["b1"].T)
    h2 = jax.nn.relu(h1 @ p["w2"].T + p["b2"].T)
    h3 = jax.nn.relu(h2 @ p["w3"].T + p["b3"].T)
    return h3 @ p["wo"].T + p["bo"].T


if __name__ == "__main__":
    key = jax.random.PRNGKey(0)
    k_param, k_x, k_xb = jax.random.split(key, 3)

    params = init_params(k_param)

    # Small batch, exact f32 path (single padded tile).
    x = jax.random.normal(k_x, (8, 14), dtype=jnp.float32)
    out = jax.block_until_ready(net_forward(x, params, compute_dtype=jnp.float32))
    ref = net_forward_ref(x, params)
    assert out.shape == (8, 1)
    assert jnp.allclose(out, ref, atol=1e-4, rtol=1e-4), "f32 mismatch vs JAX reference"

    # Multi-tile batch with a partial (un-padded) last block: 2500 = 2*1024 + 452.
    xb = jax.random.normal(k_xb, (2500, 14), dtype=jnp.float32)
    refb = net_forward_ref(xb, params)
    outb = jax.block_until_ready(
        net_forward(xb, params, tile_b=1024, compute_dtype=jnp.float32))
    assert outb.shape == (2500, 1)
    assert jnp.allclose(outb, refb, atol=1e-4, rtol=1e-4), "gridded f32 mismatch"

    # Default path: bf16 MXU operands (x cast in-kernel), f32 accumulation.
    outh = jax.block_until_ready(net_forward(xb, params, tile_b=1024))
    assert outh.shape == (2500, 1)
    assert jnp.allclose(outh, refb, atol=5e-2, rtol=5e-2), "bf16 mismatch"

    print("KERNEL_OK")
</pallas_src>

<mosaic_0001>
module attributes {stable_mosaic.version = 11 : i64} {
  func.func @_mlp_kernel(%arg0: i32, %arg1: memref<128x14xf32, #tpu.memory_space<vmem>>, %arg2: memref<28x14xf32, #tpu.memory_space<vmem>>, %arg3: memref<28x1xf32, #tpu.memory_space<vmem>>, %arg4: memref<28x28xf32, #tpu.memory_space<vmem>>, %arg5: memref<28x1xf32, #tpu.memory_space<vmem>>, %arg6: memref<28x28xf32, #tpu.memory_space<vmem>>, %arg7: memref<28x1xf32, #tpu.memory_space<vmem>>, %arg8: memref<28x1xf32, #tpu.memory_space<vmem>>, %arg9: memref<1x1xf32, #tpu.memory_space<vmem>>, %arg10: memref<1x128xf32, #tpu.memory_space<vmem>>) attributes {dimension_semantics = [#tpu.dimension_semantics<parallel>], iteration_bounds = array<i64: 1>, scalar_prefetch = 0 : i64, scratch_operands = 0 : i64, tpu.core_type = #tpu.core_type<tc>, window_params = [{transform_indices = @transform_0, window_bounds = array<i64: 128, 14>}, {pipeline_mode = #tpu.pipeline_mode<synchronous>, transform_indices = @transform_1, window_bounds = array<i64: 28, 14>}, {pipeline_mode = #tpu.pipeline_mode<synchronous>, transform_indices = @transform_2, window_bounds = array<i64: 28, 1>}, {pipeline_mode = #tpu.pipeline_mode<synchronous>, transform_indices = @transform_3, window_bounds = array<i64: 28, 28>}, {pipeline_mode = #tpu.pipeline_mode<synchronous>, transform_indices = @transform_4, window_bounds = array<i64: 28, 1>}, {pipeline_mode = #tpu.pipeline_mode<synchronous>, transform_indices = @transform_5, window_bounds = array<i64: 28, 28>}, {pipeline_mode = #tpu.pipeline_mode<synchronous>, transform_indices = @transform_6, window_bounds = array<i64: 28, 1>}, {pipeline_mode = #tpu.pipeline_mode<synchronous>, transform_indices = @transform_7, window_bounds = array<i64: 28, 1>}, {pipeline_mode = #tpu.pipeline_mode<synchronous>, transform_indices = @transform_8, window_bounds = array<i64: 1, 1>}, {transform_indices = @transform_9, window_bounds = array<i64: 1, 128>}]} {
    %c0 = arith.constant 0 : index
    %c0_0 = arith.constant 0 : index
    %0 = vector.load %arg2[%c0, %c0_0] : memref<28x14xf32, #tpu.memory_space<vmem>>, vector<28x14xf32>
    %c0_1 = arith.constant 0 : index
    %c0_2 = arith.constant 0 : index
    %1 = vector.load %arg3[%c0_1, %c0_2] : memref<28x1xf32, #tpu.memory_space<vmem>>, vector<28x1xf32>
    %c0_3 = arith.constant 0 : index
    %c0_4 = arith.constant 0 : index
    %2 = vector.load %arg4[%c0_3, %c0_4] : memref<28x28xf32, #tpu.memory_space<vmem>>, vector<28x28xf32>
    %c0_5 = arith.constant 0 : index
    %c0_6 = arith.constant 0 : index
    %3 = vector.load %arg5[%c0_5, %c0_6] : memref<28x1xf32, #tpu.memory_space<vmem>>, vector<28x1xf32>
    %c0_7 = arith.constant 0 : index
    %c0_8 = arith.constant 0 : index
    %4 = vector.load %arg6[%c0_7, %c0_8] : memref<28x28xf32, #tpu.memory_space<vmem>>, vector<28x28xf32>
    %c0_9 = arith.constant 0 : index
    %c0_10 = arith.constant 0 : index
    %5 = vector.load %arg7[%c0_9, %c0_10] : memref<28x1xf32, #tpu.memory_space<vmem>>, vector<28x1xf32>
    %c0_11 = arith.constant 0 : index
    %c0_12 = arith.constant 0 : index
    %6 = vector.load %arg8[%c0_11, %c0_12] : memref<28x1xf32, #tpu.memory_space<vmem>>, vector<28x1xf32>
    %c0_13 = arith.constant 0 : index
    %c0_14 = arith.constant 0 : index
    %7 = vector.load %arg9[%c0_13, %c0_14] : memref<1x1xf32, #tpu.memory_space<vmem>>, vector<1x1xf32>
    %c0_i32 = arith.constant 0 : i32
    %c1_i32 = arith.constant 1 : i32
    %8 = arith.muli %c0_i32, %c1_i32 : i32
    %c0_i32_15 = arith.constant 0 : i32
    %9 = arith.addi %c0_i32_15, %8 : i32
    %c128_i32 = arith.constant 128 : i32
    %10 = arith.muli %9, %c128_i32 : i32
    %11 = tpu.assume_multiple %10, 128 : i32
    %12 = arith.index_cast %11 : i32 to index
    %c0_16 = arith.constant 0 : index
    %13 = vector.load %arg1[%12, %c0_16] : memref<128x14xf32, #tpu.memory_space<vmem>>, vector<128x14xf32>
    %cst = arith.constant dense<0.000000e+00> : vector<28x128xf32>
    %14 = tpu.matmul %0, %13, %cst {dimension_numbers = #tpu.dot_dimension_numbers<[1], [1], [0], [0], [0, 0, 1, 0], [], []>} : vector<28x14xf32>, vector<128x14xf32>, vector<28x128xf32> -> vector<28x128xf32>
    %15 = vector.broadcast %1 : vector<28x1xf32> to vector<28x128xf32>
    %16 = arith.addf %14, %15 : vector<28x128xf32>
    %cst_17 = arith.constant 0.000000e+00 : f32
    %17 = vector.broadcast %cst_17 : f32 to vector<28x128xf32>
    %18 = arith.maximumf %16, %17 : vector<28x128xf32>
    %cst_18 = arith.constant dense<0.000000e+00> : vector<28x128xf32>
    %19 = tpu.matmul %2, %18, %cst_18 {dimension_numbers = #tpu.dot_dimension_numbers<[1], [0], [0], [1], [0, 0, 1, 1], [], []>} : vector<28x28xf32>, vector<28x128xf32>, vector<28x128xf32> -> vector<28x128xf32>
    %20 = vector.broadcast %3 : vector<28x1xf32> to vector<28x128xf32>
    %21 = arith.addf %19, %20 : vector<28x128xf32>
    %cst_19 = arith.constant 0.000000e+00 : f32
    %22 = vector.broadcast %cst_19 : f32 to vector<28x128xf32>
    %23 = arith.maximumf %21, %22 : vector<28x128xf32>
    %cst_20 = arith.constant dense<0.000000e+00> : vector<28x128xf32>
    %24 = tpu.matmul %4, %23, %cst_20 {dimension_numbers = #tpu.dot_dimension_numbers<[1], [0], [0], [1], [0, 0, 1, 1], [], []>} : vector<28x28xf32>, vector<28x128xf32>, vector<28x128xf32> -> vector<28x128xf32>
    %25 = vector.broadcast %5 : vector<28x1xf32> to vector<28x128xf32>
    %26 = arith.addf %24, %25 : vector<28x128xf32>
    %cst_21 = arith.constant 0.000000e+00 : f32
    %27 = vector.broadcast %cst_21 : f32 to vector<28x128xf32>
    %28 = arith.maximumf %26, %27 : vector<28x128xf32>
    %29 = vector.broadcast %6 : vector<28x1xf32> to vector<28x128xf32>
    %30 = arith.mulf %29, %28 : vector<28x128xf32>
    %cst_22 = arith.constant dense<0.000000e+00> : vector<128xf32>
    %31 = vector.multi_reduction <add>, %30, %cst_22 [0] : vector<28x128xf32> to vector<128xf32>
    %32 = vector.shape_cast %31 : vector<128xf32> to vector<1x128xf32>
    %33 = vector.broadcast %7 : vector<1x1xf32> to vector<1x128xf32>
    %34 = arith.addf %32, %33 : vector<1x128xf32>
    %c0_23 = arith.constant 0 : index
    %35 = arith.index_cast %11 : i32 to index
    %36 = vector.load %arg10[%c0_23, %35] : memref<1x128xf32, #tpu.memory_space<vmem>>, vector<1x128xf32>
    tpu.vector_store %arg10[%c0_23, %35], %34 {strides = array<i32>} : memref<1x128xf32, #tpu.memory_space<vmem>>, vector<1x128xf32>,
    %c1_i32_24 = arith.constant 1 : i32
    return
  }
  func.func @transform_0(%arg0: i32) -> (i32, i32) {
    %c0_i32 = arith.constant 0 : i32
    %c0_i32_0 = arith.constant 0 : i32
    return %arg0, %c0_i32 : i32, i32
  }
  func.func @transform_1(%arg0: i32) -> (i32, i32) {
    %c0_i32 = arith.constant 0 : i32
    %c0_i32_0 = arith.constant 0 : i32
    %c0_i32_1 = arith.constant 0 : i32
    return %c0_i32, %c0_i32_0 : i32, i32
  }
  func.func @transform_2(%arg0: i32) -> (i32, i32) {
    %c0_i32 = arith.constant 0 : i32
    %c0_i32_0 = arith.constant 0 : i32
    %c0_i32_1 = arith.constant 0 : i32
    return %c0_i32, %c0_i32_0 : i32, i32
  }
  func.func @transform_3(%arg0: i32) -> (i32, i32) {
    %c0_i32 = arith.constant 0 : i32
    %c0_i32_0 = arith.constant 0 : i32
    %c0_i32_1 = arith.constant 0 : i32
    return %c0_i32, %c0_i32_0 : i32, i32
  }
  func.func @transform_4(%arg0: i32) -> (i32, i32) {
    %c0_i32 = arith.constant 0 : i32
    %c0_i32_0 = arith.constant 0 : i32
    %c0_i32_1 = arith.constant 0 : i32
    return %c0_i32, %c0_i32_0 : i32, i32
  }
  func.func @transform_5(%arg0: i32) -> (i32, i32) {
    %c0_i32 = arith.constant 0 : i32
    %c0_i32_0 = arith.constant 0 : i32
    %c0_i32_1 = arith.constant 0 : i32
    return %c0_i32, %c0_i32_0 : i32, i32
  }
  func.func @transform_6(%arg0: i32) -> (i32, i32) {
    %c0_i32 = arith.constant 0 : i32
    %c0_i32_0 = arith.constant 0 : i32
    %c0_i32_1 = arith.constant 0 : i32
    return %c0_i32, %c0_i32_0 : i32, i32
  }
  func.func @transform_7(%arg0: i32) -> (i32, i32) {
    %c0_i32 = arith.constant 0 : i32
    %c0_i32_0 = arith.constant 0 : i32
    %c0_i32_1 = arith.constant 0 : i32
    return %c0_i32, %c0_i32_0 : i32, i32
  }
  func.func @transform_8(%arg0: i32) -> (i32, i32) {
    %c0_i32 = arith.constant 0 : i32
    %c0_i32_0 = arith.constant 0 : i32
    %c0_i32_1 = arith.constant 0 : i32
    return %c0_i32, %c0_i32_0 : i32, i32
  }
  func.func @transform_9(%arg0: i32) -> (i32, i32) {
    %c0_i32 = arith.constant 0 : i32
    %c0_i32_0 = arith.constant 0 : i32
    return %c0_i32, %arg0 : i32, i32
  }
}

</mosaic_0001>

<llo_original>
// kernel: net_forward.1
$region0: #{net_forward.1}
  #allocation0 [shape = 'u32[]', space=smem, size = 0x4, offset = 0x4, fixed_abs, tag = 'smem constant byte address 0x4 - core index']
  #allocation1 [shape = 'u32[144,128]{1,0:T(1,128)}', space=vmem, size = 0x12000, scoped, tag = 'internal scratch']
  #allocation2 [shape = 'f32[1,1]{1,0:T(1,128)S(1)}', space=vmem, size = 0x200, scoped, tag = 'scoped memory for net_forward.1']
  %s0 = inlined_call_operand.vmem [shape: f32[128,14], index: 0, kind: input, shape index: {}]
  %s1 = inlined_call_operand.vmem [shape: f32[28,14], index: 1, kind: input, shape index: {}]
  %s2 = inlined_call_operand.vmem [shape: f32[28,1], index: 2, kind: input, shape index: {}]
  %s3 = inlined_call_operand.vmem [shape: f32[28,28], index: 3, kind: input, shape index: {}]
  %s4 = inlined_call_operand.vmem [shape: f32[28,1], index: 4, kind: input, shape index: {}]
  %s5 = inlined_call_operand.vmem [shape: f32[28,28], index: 5, kind: input, shape index: {}]
  %s6 = inlined_call_operand.vmem [shape: f32[28,1], index: 6, kind: input, shape index: {}]
  %s7 = inlined_call_operand.vmem [shape: f32[28,1], index: 7, kind: input, shape index: {}]
  %s8 = inlined_call_operand.<no memory space> [shape: f32[1,1], index: 8, kind: input, shape index: {}]
  %s9 = inlined_call_operand.vmem [shape: f32[1,128], index: 9, kind: output, shape index: {}]
  %s10 = sld [smem:[#allocation0]]
  $region46: #{net_forward.1} parent=0
    _
  %s12 = ssub.s32 1, %s10
  %s13 = scalar_select 0, %s12, %s10
  %v14 = vstv %s8
  %15 = vst [vmem:[#allocation2] sm:$0x1] %v14
  // Predicated region
  $region2: #{net_forward.1} parent=0 // pred_check
    _
  $region3: #{net_forward.1} parent=0 // pred_check_branch
    %17 = sbr.rel (0) target = $region5
  $region4: #{net_forward.1} parent=0 // pred_region
    _
  $region5: #{net_forward.1} parent=0 // pred_fallthru
    _
  // Predicated region
  $region6: #{net_forward.1} parent=0 // pred_check
    _
  $region7: #{net_forward.1} parent=0 // pred_check_branch
    %19 = sbr.rel (0) target = $region9
  $region8: #{net_forward.1} parent=0 // pred_region
    _
  $region9: #{net_forward.1} parent=0 // pred_fallthru
    _
  // Predicated region
  $region10: #{net_forward.1} parent=0 // pred_check
    _
  $region11: #{net_forward.1} parent=0 // pred_check_branch
    %21 = sbr.rel (0) target = $region13
  $region12: #{net_forward.1} parent=0 // pred_region
    _
  $region13: #{net_forward.1} parent=0 // pred_fallthru
    _
  // Predicated region
  $region14: #{net_forward.1} parent=0 // pred_check
    _
  $region15: #{net_forward.1} parent=0 // pred_check_branch
    %23 = sbr.rel (0) target = $region17
  $region16: #{net_forward.1} parent=0 // pred_region
    _
  $region17: #{net_forward.1} parent=0 // pred_fallthru
    _
  // Predicated region
  $region18: #{net_forward.1} parent=0 // pred_check
    _
  $region19: #{net_forward.1} parent=0 // pred_check_branch
    %25 = sbr.rel (0) target = $region21
  $region20: #{net_forward.1} parent=0 // pred_region
    _
  $region21: #{net_forward.1} parent=0 // pred_fallthru
    _
  // Predicated region
  $region22: #{net_forward.1} parent=0 // pred_check
    _
  $region23: #{net_forward.1} parent=0 // pred_check_branch
    %27 = sbr.rel (0) target = $region25
  $region24: #{net_forward.1} parent=0 // pred_region
    _
  $region25: #{net_forward.1} parent=0 // pred_fallthru
    _
  // Predicated region
  $region26: #{net_forward.1} parent=0 // pred_check
    _
  $region27: #{net_forward.1} parent=0 // pred_check_branch
    %29 = sbr.rel (0) target = $region29
  $region28: #{net_forward.1} parent=0 // pred_region
    _
  $region29: #{net_forward.1} parent=0 // pred_fallthru
    _
  // Predicated region
  $region30: #{net_forward.1} parent=0 // pred_check
    _
  $region31: #{net_forward.1} parent=0 // pred_check_branch
    %31 = sbr.rel (0) target = $region33
  $region32: #{net_forward.1} parent=0 // pred_region
    _
  $region33: #{net_forward.1} parent=0 // pred_fallthru
    _
  // Predicated region
  $region34: #{net_forward.1} parent=0 // pred_check
    _
  $region35: #{net_forward.1} parent=0 // pred_check_branch
    %33 = sbr.rel (0) target = $region37
  $region36: #{net_forward.1} parent=0 // pred_region
    _
  $region37: #{net_forward.1} parent=0 // pred_fallthru
    _
  %v34 = vld [vmem:[%s1] sm:$0xff]
  %v35 = vld [vmem:[%s1 + $0x8] sm:$0xff]
  %v36 = vld [vmem:[%s1 + $0x10] sm:$0xff]
  %v37 = vld [vmem:[%s1 + $0x18] sm:$0xf]
  %v38 = vld [vmem:[%s2] sm:$0xff]
  %v39 = vld [vmem:[%s2 + $0x8] sm:$0xff]
  %v40 = vld [vmem:[%s2 + $0x10] sm:$0xff]
  %v41 = vld [vmem:[%s2 + $0x18] sm:$0xf]
  %v42 = vld [vmem:[%s3] sm:$0xff]
  %v43 = vld [vmem:[%s3 + $0x8] sm:$0xff]
  %v44 = vld [vmem:[%s3 + $0x10] sm:$0xff]
  %v45 = vld [vmem:[%s3 + $0x18] sm:$0xf]
  %v46 = vld [vmem:[%s4] sm:$0xff]
  %v47 = vld [vmem:[%s4 + $0x8] sm:$0xff]
  %v48 = vld [vmem:[%s4 + $0x10] sm:$0xff]
  %v49 = vld [vmem:[%s4 + $0x18] sm:$0xf]
  %v50 = vld [vmem:[%s5] sm:$0xff]
  %v51 = vld [vmem:[%s5 + $0x8] sm:$0xff]
  %v52 = vld [vmem:[%s5 + $0x10] sm:$0xff]
  %v53 = vld [vmem:[%s5 + $0x18] sm:$0xf]
  %v54 = vld [vmem:[%s6] sm:$0xff]
  %v55 = vld [vmem:[%s6 + $0x8] sm:$0xff]
  %v56 = vld [vmem:[%s6 + $0x10] sm:$0xff]
  %v57 = vld [vmem:[%s6 + $0x18] sm:$0xf]
  %v58 = vld [vmem:[%s7] sm:$0xff]
  %v59 = vld [vmem:[%s7 + $0x8] sm:$0xff]
  %v60 = vld [vmem:[%s7 + $0x10] sm:$0xff]
  %v61 = vld [vmem:[%s7 + $0x18] sm:$0xf]
  %v62 = vld [vmem:[#allocation2] sm:$0x1]
  %v63 = vld [vmem:[%s0] sm:$0xff]
  %v64 = vld [vmem:[%s0 + $0x8] sm:$0xff]
  %v65 = vld [vmem:[%s0 + $0x10] sm:$0xff]
  %v66 = vld [vmem:[%s0 + $0x18] sm:$0xff]
  %v67 = vld [vmem:[%s0 + $0x20] sm:$0xff]
  %v68 = vld [vmem:[%s0 + $0x28] sm:$0xff]
  %v69 = vld [vmem:[%s0 + $0x30] sm:$0xff]
  %v70 = vld [vmem:[%s0 + $0x38] sm:$0xff]
  %v71 = vld [vmem:[%s0 + $0x40] sm:$0xff]
  %v72 = vld [vmem:[%s0 + $0x48] sm:$0xff]
  %v73 = vld [vmem:[%s0 + $0x50] sm:$0xff]
  %v74 = vld [vmem:[%s0 + $0x58] sm:$0xff]
  %v75 = vld [vmem:[%s0 + $0x60] sm:$0xff]
  %v76 = vld [vmem:[%s0 + $0x68] sm:$0xff]
  %v77 = vld [vmem:[%s0 + $0x70] sm:$0xff]
  %v78 = vld [vmem:[%s0 + $0x78] sm:$0xff]
  %80 = vset.pattern.permute.xlu0 0
  %81 = vperm.xlu0 %80, %v38
  %v82 = vpop.permute.xlu0 %81
  %85 = vset.pattern.permute.xlu0 0
  %86 = vperm.xlu0 %85, %v39
  %v87 = vpop.permute.xlu0 %86
  %90 = vset.pattern.permute.xlu0 0
  %91 = vperm.xlu0 %90, %v40
  %v92 = vpop.permute.xlu0 %91
  %95 = vset.pattern.permute.xlu0 0
  %96 = vperm.xlu0 %95, %v41
  %v97 = vpop.permute.xlu0 %96
  %vm99 = vcmask 113664
  %v101 = vsel %vm99, %v34, 0
  %v104 = vsel %vm99, %v35, 0
  %v107 = vsel %vm99, %v36, 0
  %v110 = vsel %vm99, %v37, 0
  %v113 = vsel %vm99, %v63, 0
  %v116 = vsel %vm99, %v64, 0
  %v119 = vsel %vm99, %v65, 0
  %v122 = vsel %vm99, %v66, 0
  %v125 = vsel %vm99, %v67, 0
  %v128 = vsel %vm99, %v68, 0
  %v131 = vsel %vm99, %v69, 0
  %v134 = vsel %vm99, %v70, 0
  %v137 = vsel %vm99, %v71, 0
  %v140 = vsel %vm99, %v72, 0
  %v143 = vsel %vm99, %v73, 0
  %v146 = vsel %vm99, %v74, 0
  %v149 = vsel %vm99, %v75, 0
  %v152 = vsel %vm99, %v76, 0
  %v155 = vsel %vm99, %v77, 0
  %v158 = vsel %vm99, %v78, 0
  %160 = vmatprep.subr.mxu0 0.0
  %161 = vmatpush1.xpose.msra.mxu0 %v113
  %162 = vmatprep.subr.mxu0 0.0
  %163 = vmatpush1.xpose.msra.mxu0 %v116
  %164 = vmatprep.subr.mxu0 0.0
  %165 = vmatpush1.xpose.msra.mxu0 %v119
  %166 = vmatprep.subr.mxu0 0.0
  %167 = vmatpush1.xpose.msra.mxu0 %v122
  %168 = vmatprep.subr.mxu0 0.0
  %169 = vmatpush1.xpose.msra.mxu0 %v125
  %170 = vmatprep.subr.mxu0 0.0
  %171 = vmatpush1.xpose.msra.mxu0 %v128
  %172 = vmatprep.subr.mxu0 0.0
  %173 = vmatpush1.xpose.msra.mxu0 %v131
  %174 = vmatprep.subr.mxu0 0.0
  %175 = vmatpush1.xpose.msra.mxu0 %v134
  %176 = vmatprep.subr.mxu0 0.0
  %177 = vmatpush1.xpose.msra.mxu0 %v137
  %178 = vmatprep.subr.mxu0 0.0
  %179 = vmatpush1.xpose.msra.mxu0 %v140
  %180 = vmatprep.subr.mxu0 0.0
  %181 = vmatpush1.xpose.msra.mxu0 %v143
  %182 = vmatprep.subr.mxu0 0.0
  %183 = vmatpush1.xpose.msra.mxu0 %v146
  %184 = vmatprep.subr.mxu0 0.0
  %185 = vmatpush1.xpose.msra.mxu0 %v149
  %186 = vmatprep.subr.mxu0 0.0
  %187 = vmatpush1.xpose.msra.mxu0 %v152
  %188 = vmatprep.subr.mxu0 0.0
  %189 = vmatpush1.xpose.msra.mxu0 %v155
  %190 = vmatprep.subr.mxu0 0.0
  %191 = vmatpush1.xpose.msra.mxu0 %v158
  %192 = vmatprep.subr.mxu0 0.0
  %193 = vmatpush1.xpose.msra.mxu0 0.0
  %194 = vmatprep.subr.mxu0 0.0
  %195 = vmatpush1.xpose.msra.mxu0 0.0
  %196 = vmatprep.subr.mxu0 0.0
  %197 = vmatpush1.xpose.msra.mxu0 0.0
  %198 = vmatprep.subr.mxu0 0.0
  %199 = vmatpush1.xpose.msra.mxu0 0.0
  %200 = vmatprep.subr.mxu0 0.0
  %201 = vmatpush1.xpose.msra.mxu0 0.0
  %202 = vmatprep.subr.mxu0 0.0
  %203 = vmatpush1.xpose.msra.mxu0 0.0
  %204 = vmatprep.subr.mxu0 0.0
  %205 = vmatpush1.xpose.msra.mxu0 0.0
  %206 = vmatprep.subr.mxu0 0.0
  %207 = vmatpush1.xpose.msra.mxu0 0.0
  %208 = vmatprep.subr.mxu0 0.0
  %209 = vmatpush1.xpose.msra.mxu0 0.0
  %210 = vmatprep.subr.mxu0 0.0
  %211 = vmatpush1.xpose.msra.mxu0 0.0
  %212 = vmatprep.subr.mxu0 0.0
  %213 = vmatpush1.xpose.msra.mxu0 0.0
  %214 = vmatprep.subr.mxu0 0.0
  %215 = vmatpush1.xpose.msra.mxu0 0.0
  %216 = vmatprep.subr.mxu0 0.0
  %217 = vmatpush1.xpose.msra.mxu0 0.0
  %218 = vmatprep.subr.mxu0 0.0
  %219 = vmatpush1.xpose.msra.mxu0 0.0
  %220 = vmatprep.subr.mxu0 0.0
  %221 = vmatpush1.xpose.msra.mxu0 0.0
  %222 = vmatprep.subr.mxu0 0.0
  %223 = vmatpush1.xpose.msra.mxu0 0.0
  %224 = vmatprep.mubr.f32.mxu0 0.0
  %225 = vmatmul.mubr.f32.gmra.mrb[0].mxu0 %v101
  %v226 = vpop.f32.mrb[0].mxu0
  %v227 = vadd.f32 %v82, %v226
  %v228 = vpop.f32.mrb[0].mxu0
  %229 = vmatprep.mubr.f32.mxu0 0.0
  %230 = vmatmul.mubr.f32.gmra.mrb[0].mxu0 %v104
  %v231 = vpop.f32.mrb[0].mxu0
  %v232 = vadd.f32 %v87, %v231
  %v233 = vpop.f32.mrb[0].mxu0
  %234 = vmatprep.mubr.f32.mxu0 0.0
  %235 = vmatmul.mubr.f32.gmra.mrb[0].mxu0 %v107
  %v236 = vpop.f32.mrb[0].mxu0
  %v237 = vadd.f32 %v92, %v236
  %v238 = vpop.f32.mrb[0].mxu0
  %239 = vmatprep.mubr.f32.mxu0 0.0
  %240 = vmatmul.mubr.f32.gmra.mrb[0].mxu0 %v110
  %v241 = vpop.f32.mrb[0].mxu0
  %v242 = vadd.f32 %v97, %v241
  %v243 = vpop.f32.mrb[0].mxu0
  %244 = vdwg.mxu0
  %v245 = vmax.f32 %v227, 0.0
  %v246 = vmax.f32 %v232, 0.0
  %v247 = vmax.f32 %v237, 0.0
  %v248 = vmax.f32 %v242, 0.0
  %250 = vset.pattern.permute.xlu0 0
  %251 = vperm.xlu0 %250, %v46
  %v252 = vpop.permute.xlu0 %251
  %255 = vset.pattern.permute.xlu0 0
  %256 = vperm.xlu0 %255, %v47
  %v257 = vpop.permute.xlu0 %256
  %260 = vset.pattern.permute.xlu0 0
  %261 = vperm.xlu0 %260, %v48
  %v262 = vpop.permute.xlu0 %261
  %265 = vset.pattern.permute.xlu0 0
  %266 = vperm.xlu0 %265, %v49
  %v267 = vpop.permute.xlu0 %266
  %vm269 = vcmask 228352
  %v271 = vsel %vm269, %v42, 0
  %v274 = vsel %vm269, %v43, 0
  %v277 = vsel %vm269, %v44, 0
  %v280 = vsel %vm269, %v45, 0
  %vm282 = vcmask 1043456
  %v284 = vsel %vm282, %v248, 0
  %286 = vmatprep.subr.mxu0 0.0
  %287 = vmatpush1.msra.mxu0 %v245
  %288 = vmatprep.subr.mxu0 0.0
  %289 = vmatpush1.msra.mxu0 %v246
  %290 = vmatprep.subr.mxu0 0.0
  %291 = vmatpush1.msra.mxu0 %v247
  %292 = vmatprep.subr.mxu0 0.0
  %293 = vmatpush1.msra.mxu0 %v284
  %294 = vmatprep.subr.mxu0 0.0
  %295 = vmatpush1.msra.mxu0 0.0
  %296 = vmatprep.subr.mxu0 0.0
  %297 = vmatpush1.msra.mxu0 0.0
  %298 = vmatprep.subr.mxu0 0.0
  %299 = vmatpush1.msra.mxu0 0.0
  %300 = vmatprep.subr.mxu0 0.0
  %301 = vmatpush1.msra.mxu0 0.0
  %302 = vmatprep.subr.mxu0 0.0
  %303 = vmatpush1.msra.mxu0 0.0
  %304 = vmatprep.subr.mxu0 0.0
  %305 = vmatpush1.msra.mxu0 0.0
  %306 = vmatprep.subr.mxu0 0.0
  %307 = vmatpush1.msra.mxu0 0.0
  %308 = vmatprep.subr.mxu0 0.0
  %309 = vmatpush1.msra.mxu0 0.0
  %310 = vmatprep.subr.mxu0 0.0
  %311 = vmatpush1.msra.mxu0 0.0
  %312 = vmatprep.subr.mxu0 0.0
  %313 = vmatpush1.msra.mxu0 0.0
  %314 = vmatprep.subr.mxu0 0.0
  %315 = vmatpush1.msra.mxu0 0.0
  %316 = vmatprep.subr.mxu0 0.0
  %317 = vmatpush1.msra.mxu0 0.0
  %318 = vmatprep.subr.mxu0 0.0
  %319 = vmatpush1.msra.mxu0 0.0
  %320 = vmatprep.subr.mxu0 0.0
  %321 = vmatpush1.msra.mxu0 0.0
  %322 = vmatprep.subr.mxu0 0.0
  %323 = vmatpush1.msra.mxu0 0.0
  %324 = vmatprep.subr.mxu0 0.0
  %325 = vmatpush1.msra.mxu0 0.0
  %326 = vmatprep.subr.mxu0 0.0
  %327 = vmatpush1.msra.mxu0 0.0
  %328 = vmatprep.subr.mxu0 0.0
  %329 = vmatpush1.msra.mxu0 0.0
  %330 = vmatprep.subr.mxu0 0.0
  %331 = vmatpush1.msra.mxu0 0.0
  %332 = vmatprep.subr.mxu0 0.0
  %333 = vmatpush1.msra.mxu0 0.0
  %334 = vmatprep.subr.mxu0 0.0
  %335 = vmatpush1.msra.mxu0 0.0
  %336 = vmatprep.subr.mxu0 0.0
  %337 = vmatpush1.msra.mxu0 0.0
  %338 = vmatprep.subr.mxu0 0.0
  %339 = vmatpush1.msra.mxu0 0.0
  %340 = vmatprep.subr.mxu0 0.0
  %341 = vmatpush1.msra.mxu0 0.0
  %342 = vmatprep.subr.mxu0 0.0
  %343 = vmatpush1.msra.mxu0 0.0
  %344 = vmatprep.subr.mxu0 0.0
  %345 = vmatpush1.msra.mxu0 0.0
  %346 = vmatprep.subr.mxu0 0.0
  %347 = vmatpush1.msra.mxu0 0.0
  %348 = vmatprep.subr.mxu0 0.0
  %349 = vmatpush1.msra.mxu0 0.0
  %350 = vmatprep.mubr.f32.mxu0 0.0
  %351 = vmatmul.mubr.f32.gmra.mrb[0].mxu0 %v271
  %v352 = vpop.f32.mrb[0].mxu0
  %v353 = vadd.f32 %v252, %v352
  %v354 = vpop.f32.mrb[0].mxu0
  %355 = vmatprep.mubr.f32.mxu0 0.0
  %356 = vmatmul.mubr.f32.gmra.mrb[0].mxu0 %v274
  %v357 = vpop.f32.mrb[0].mxu0
  %v358 = vadd.f32 %v257, %v357
  %v359 = vpop.f32.mrb[0].mxu0
  %360 = vmatprep.mubr.f32.mxu0 0.0
  %361 = vmatmul.mubr.f32.gmra.mrb[0].mxu0 %v277
  %v362 = vpop.f32.mrb[0].mxu0
  %v363 = vadd.f32 %v262, %v362
  %v364 = vpop.f32.mrb[0].mxu0
  %365 = vmatprep.mubr.f32.mxu0 0.0
  %366 = vmatmul.mubr.f32.gmra.mrb[0].mxu0 %v280
  %v367 = vpop.f32.mrb[0].mxu0
  %v368 = vadd.f32 %v267, %v367
  %v369 = vpop.f32.mrb[0].mxu0
  %370 = vdwg.mxu0
  %v371 = vmax.f32 %v353, 0.0
  %v372 = vmax.f32 %v358, 0.0
  %v373 = vmax.f32 %v363, 0.0
  %v374 = vmax.f32 %v368, 0.0
  %376 = vset.pattern.permute.xlu0 0
  %377 = vperm.xlu0 %376, %v54
  %v378 = vpop.permute.xlu0 %377
  %381 = vset.pattern.permute.xlu0 0
  %382 = vperm.xlu0 %381, %v55
  %v383 = vpop.permute.xlu0 %382
  %386 = vset.pattern.permute.xlu0 0
  %387 = vperm.xlu0 %386, %v56
  %v388 = vpop.permute.xlu0 %387
  %391 = vset.pattern.permute.xlu0 0
  %392 = vperm.xlu0 %391, %v57
  %v393 = vpop.permute.xlu0 %392
  %v396 = vsel %vm269, %v50, 0
  %v399 = vsel %vm269, %v51, 0
  %v402 = vsel %vm269, %v52, 0
  %v405 = vsel %vm269, %v53, 0
  %v408 = vsel %vm282, %v374, 0
  %410 = vmatprep.subr.mxu0 0.0
  %411 = vmatpush1.msra.mxu0 %v371
  %412 = vmatprep.subr.mxu0 0.0
  %413 = vmatpush1.msra.mxu0 %v372
  %414 = vmatprep.subr.mxu0 0.0
  %415 = vmatpush1.msra.mxu0 %v373
  %416 = vmatprep.subr.mxu0 0.0
  %417 = vmatpush1.msra.mxu0 %v408
  %418 = vmatprep.subr.mxu0 0.0
  %419 = vmatpush1.msra.mxu0 0.0
  %420 = vmatprep.subr.mxu0 0.0
  %421 = vmatpush1.msra.mxu0 0.0
  %422 = vmatprep.subr.mxu0 0.0
  %423 = vmatpush1.msra.mxu0 0.0
  %424 = vmatprep.subr.mxu0 0.0
  %425 = vmatpush1.msra.mxu0 0.0
  %426 = vmatprep.subr.mxu0 0.0
  %427 = vmatpush1.msra.mxu0 0.0
  %428 = vmatprep.subr.mxu0 0.0
  %429 = vmatpush1.msra.mxu0 0.0
  %430 = vmatprep.subr.mxu0 0.0
  %431 = vmatpush1.msra.mxu0 0.0
  %432 = vmatprep.subr.mxu0 0.0
  %433 = vmatpush1.msra.mxu0 0.0
  %434 = vmatprep.subr.mxu0 0.0
  %435 = vmatpush1.msra.mxu0 0.0
  %436 = vmatprep.subr.mxu0 0.0
  %437 = vmatpush1.msra.mxu0 0.0
  %438 = vmatprep.subr.mxu0 0.0
  %439 = vmatpush1.msra.mxu0 0.0
  %440 = vmatprep.subr.mxu0 0.0
  %441 = vmatpush1.msra.mxu0 0.0
  %442 = vmatprep.subr.mxu0 0.0
  %443 = vmatpush1.msra.mxu0 0.0
  %444 = vmatprep.subr.mxu0 0.0
  %445 = vmatpush1.msra.mxu0 0.0
  %446 = vmatprep.subr.mxu0 0.0
  %447 = vmatpush1.msra.mxu0 0.0
  %448 = vmatprep.subr.mxu0 0.0
  %449 = vmatpush1.msra.mxu0 0.0
  %450 = vmatprep.subr.mxu0 0.0
  %451 = vmatpush1.msra.mxu0 0.0
  %452 = vmatprep.subr.mxu0 0.0
  %453 = vmatpush1.msra.mxu0 0.0
  %454 = vmatprep.subr.mxu0 0.0
  %455 = vmatpush1.msra.mxu0 0.0
  %456 = vmatprep.subr.mxu0 0.0
  %457 = vmatpush1.msra.mxu0 0.0
  %458 = vmatprep.subr.mxu0 0.0
  %459 = vmatpush1.msra.mxu0 0.0
  %460 = vmatprep.subr.mxu0 0.0
  %461 = vmatpush1.msra.mxu0 0.0
  %462 = vmatprep.subr.mxu0 0.0
  %463 = vmatpush1.msra.mxu0 0.0
  %464 = vmatprep.subr.mxu0 0.0
  %465 = vmatpush1.msra.mxu0 0.0
  %466 = vmatprep.subr.mxu0 0.0
  %467 = vmatpush1.msra.mxu0 0.0
  %468 = vmatprep.subr.mxu0 0.0
  %469 = vmatpush1.msra.mxu0 0.0
  %470 = vmatprep.subr.mxu0 0.0
  %471 = vmatpush1.msra.mxu0 0.0
  %472 = vmatprep.subr.mxu0 0.0
  %473 = vmatpush1.msra.mxu0 0.0
  %474 = vmatprep.mubr.f32.mxu0 0.0
  %475 = vmatmul.mubr.f32.gmra.mrb[0].mxu0 %v396
  %v476 = vpop.f32.mrb[0].mxu0
  %v477 = vadd.f32 %v378, %v476
  %v478 = vpop.f32.mrb[0].mxu0
  %479 = vmatprep.mubr.f32.mxu0 0.0
  %480 = vmatmul.mubr.f32.gmra.mrb[0].mxu0 %v399
  %v481 = vpop.f32.mrb[0].mxu0
  %v482 = vadd.f32 %v383, %v481
  %v483 = vpop.f32.mrb[0].mxu0
  %484 = vmatprep.mubr.f32.mxu0 0.0
  %485 = vmatmul.mubr.f32.gmra.mrb[0].mxu0 %v402
  %v486 = vpop.f32.mrb[0].mxu0
  %v487 = vadd.f32 %v388, %v486
  %v488 = vpop.f32.mrb[0].mxu0
  %489 = vmatprep.mubr.f32.mxu0 0.0
  %490 = vmatmul.mubr.f32.gmra.mrb[0].mxu0 %v405
  %v491 = vpop.f32.mrb[0].mxu0
  %v492 = vadd.f32 %v393, %v491
  %v493 = vpop.f32.mrb[0].mxu0
  %494 = vdwg.mxu0
  %v495 = vmax.f32 %v477, 0.0
  %v496 = vmax.f32 %v482, 0.0
  %v497 = vmax.f32 %v487, 0.0
  %v498 = vmax.f32 %v492, 0.0
  %500 = vset.pattern.permute.xlu0 0
  %501 = vperm.xlu0 %500, %v58
  %v502 = vpop.permute.xlu0 %501
  %505 = vset.pattern.permute.xlu0 0
  %506 = vperm.xlu0 %505, %v59
  %v507 = vpop.permute.xlu0 %506
  %510 = vset.pattern.permute.xlu0 0
  %511 = vperm.xlu0 %510, %v60
  %v512 = vpop.permute.xlu0 %511
  %515 = vset.pattern.permute.xlu0 0
  %516 = vperm.xlu0 %515, %v61
  %v517 = vpop.permute.xlu0 %516
  %v519 = vmul.f32 %v502, %v495
  %v520 = vmul.f32 %v507, %v496
  %v521 = vmul.f32 %v512, %v497
  %v522 = vmul.f32 %v517, %v498
  %v523 = vadd.f32 %v519, %v520
  %v524 = vadd.f32 %v523, %v521
  %v525 = vsel %vm282, %v522, 0.0
  %v526 = vadd.f32 %v524, %v525
  %v527 = vrot.slane %v526, 4
  %v528 = vadd.f32 %v526, %v527
  %v529 = vrot.slane %v528, 2
  %v530 = vadd.f32 %v528, %v529
  %v531 = vrot.slane %v530, 1
  %v532 = vadd.f32 %v530, %v531
  %534 = vset.pattern.permute.xlu0 0
  %535 = vperm.xlu0 %534, %v62
  %v536 = vpop.permute.xlu0 %535
  %v538 = vlaneseq
  %v539 = vshrl.u32 %v538, 7
  %v540 = vsub.s32 0, %v539
  %v541 = vrot.slane %v536, %v540
  %v542 = vadd.f32 %v532, %v541
  %543 = vst [vmem:[%s9] sm:$0x1] %v542
  // Predicated region
  $region38: #{net_forward.1} parent=0 // pred_check
    _
  $region39: #{net_forward.1} parent=0 // pred_check_branch
    %545 = sbr.rel (0) target = $region41
  $region40: #{net_forward.1} parent=0 // pred_region
    _
  $region41: #{net_forward.1} parent=0 // pred_fallthru
    _
  // Predicated region
  $region42: #{net_forward.1} parent=0 // pred_check
    _
  $region43: #{net_forward.1} parent=0 // pred_check_branch
    %547 = sbr.rel (0) target = $region45
  $region44: #{net_forward.1} parent=0 // pred_region
    _
  $region45: #{net_forward.1} parent=0 // pred_fallthru
    _

</llo_original>
